<compile_context>
chip_gen: v5e
topology: v5e:2x2
jax: 0.10.0
libtpu: 0.0.40
codegen_flags: <defaults>
</compile_context>

<pallas_src>
import functools

import jax
import jax.numpy as jnp
from jax.experimental import pallas as pl
from jax.experimental.pallas import tpu as pltpu

_LANES = 128


def _inv_depth_l1_kernel(pred_ref, out_ref, acc_ref, *, tr, steps_per_core,
                         r_valid, needs_valid):
    """One grid step over an (N, C, tr, 128) spatial tile.

    pred_ref, out_ref : (N, C, tr, 128) VMEM input tiles
    acc_ref           : (1, 2, tr, 128) VMEM output block (per-core accumulator)
                        slot 0 = masked |diff| partials, slot 1 = mask partials
    """
    c = pl.program_id(0)   # core split (parallel)
    i = pl.program_id(1)   # row-tile step within this core (arbitrary)

    @pl.when(i == 0)
    def _init():
        acc_ref[...] = jnp.zeros_like(acc_ref)

    pred = pred_ref[...].astype(jnp.float32)   # (N, C, tr, 128)
    out = out_ref[...].astype(jnp.float32)     # (N, C, tr, 128)

    # Channel reductions first (review item 1): the 0/1 mask does not depend on
    # C, so reduce |pred - out| over C before masking.
    chan_sum = jnp.sum(out, axis=1)                       # (N, tr, 128)
    abs_sum = jnp.sum(jnp.abs(pred - out), axis=1)        # (N, tr, 128)
    mask = chan_sum != 0.0                                # (N, tr, 128) bool

    if needs_valid:
        # Only compiled in for uneven tiling / uneven core splits: kills OOB
        # rows of the partial last tile and duplicate clamped tiles.
        tile_idx = c * steps_per_core + i
        row_ids = jax.lax.broadcasted_iota(jnp.int32, (tr, _LANES), 0) + tile_idx * tr
        mask = mask & (row_ids < r_valid)[None]           # (N, tr, 128)

    # NOTE: jnp.where (a select) — NaN/Inf garbage in masked-out pixels cannot
    # poison the sum (slightly stricter than PyTorch's mask-multiply).
    masked_abs = jnp.where(mask, abs_sum, 0.0)            # (N, tr, 128)

    # Element-wise (VPU) accumulation into lane-dense partials; the cross-lane
    # reduction is deferred to the wrapper (runs exactly once).
    acc_ref[0, 0] += jnp.sum(masked_abs, axis=0)                      # (tr, 128)
    acc_ref[0, 1] += jnp.sum(mask.astype(jnp.float32), axis=0)        # (tr, 128)


@functools.lru_cache(maxsize=1)
def _tpu_defaults():
    """Generation-aware defaults: (num_cores, target_block_bytes, vmem_cap_bytes)."""
    kind = ""
    try:
        kind = jax.devices()[0].device_kind.lower()
    except Exception:  # pragma: no cover - defensive; assume single-TC TPU.
        pass
    if "v7" in kind:
        # 2 TensorCores per chip; 64 MiB physical VMEM per TC -> cap below it.
        return 2, 4 * 1024 * 1024, 56 * 1024 * 1024
    # v5e / v6e (and unknown): single TensorCore, 128 MiB physical VMEM.
    return 1, 4 * 1024 * 1024, 100 * 1024 * 1024


def _choose_row_tile(n, c, r_total, itemsize, target_block_bytes):
    """Rows-of-128 per block (~target_block_bytes per input block), rounded to
    the dtype's sublane pack (8 for f32, 16 for bf16, 32 for int8/fp8)."""
    per_row_bytes = max(1, n * c * _LANES * itemsize)
    tr = target_block_bytes // per_row_bytes
    pack = max(8, 32 // max(1, itemsize))
    tr = max(pack, (tr // pack) * pack)
    if tr >= r_total:
        return r_total          # single row tile; full-extent block is legal
    return tr


@functools.partial(
    jax.jit, static_argnames=("num_cores", "target_block_bytes", "vmem_cap_bytes"))
def _inverse_depth_l1_loss_impl(x_pred, x_output, *, num_cores,
                                target_block_bytes, vmem_cap_bytes):
    N, C, H, W = x_pred.shape
    HW = H * W

    pred = x_pred.reshape(N, C, HW)
    out = x_output.reshape(N, C, HW)

    # Pad only in the rare H*W % 128 != 0 case. Zero padding is mask-safe
    # (channel-sum == 0 -> excluded from numerator and count).
    pad = (-HW) % _LANES
    if pad:
        # TODO(synk): replace this HBM pad copy with a flat (N, C, HW)-blocked
        # kernel + in-kernel lane-tail mask for the H*W % 128 != 0 case.
        pred = jnp.pad(pred, ((0, 0), (0, 0), (0, pad)))
        out = jnp.pad(out, ((0, 0), (0, 0), (0, pad)))
    r_total = (HW + pad) // _LANES

    # Lane-dense 4D layout: (N, C, rows, 128). Contiguous (free) reshape.
    pred = pred.reshape(N, C, r_total, _LANES)
    out = out.reshape(N, C, r_total, _LANES)

    itemsize = jnp.dtype(x_pred.dtype).itemsize
    tr = _choose_row_tile(N, C, r_total, itemsize, target_block_bytes)
    num_tiles = -(-r_total // tr)
    ncores = max(1, min(num_cores, num_tiles))
    steps_per_core = -(-num_tiles // ncores)

    # Static specialization (review item 2): drop the validity mask and the
    # index clamp whenever the tiling / core split is exact.
    tiles_exact = (num_tiles * tr == r_total)
    split_exact = (ncores * steps_per_core == num_tiles)
    needs_valid = not (tiles_exact and split_exact)

    if split_exact:
        def in_map(c, i):
            return (0, 0, c * steps_per_core + i, 0)
    else:
        def in_map(c, i):
            # Clamp so fully out-of-range tiles re-read the last valid tile;
            # the kernel's row-validity mask zeroes their contribution.
            return (0, 0, jnp.minimum(c * steps_per_core + i, num_tiles - 1), 0)

    kernel = functools.partial(
        _inv_depth_l1_kernel, tr=tr, steps_per_core=steps_per_core,
        r_valid=r_total, needs_valid=needs_valid)

    # VMEM budget derived from actual block usage (2 inputs x 2 pipeline
    # buffers + double-buffered output block + generous fp32-temp allowance),
    # capped under the generation's physical/scoped budget.
    in_block_bytes = N * C * tr * _LANES * itemsize
    f32_block_bytes = N * C * tr * _LANES * 4
    out_block_bytes = 2 * tr * _LANES * 4
    vmem_need = 4 * in_block_bytes + 2 * out_block_bytes + 4 * f32_block_bytes
    vmem_limit = int(min(vmem_cap_bytes, max(vmem_need, 16 << 20) + (16 << 20)))

    partials = pl.pallas_call(
        kernel,
        out_shape=jax.ShapeDtypeStruct((ncores, 2, tr, _LANES), jnp.float32),
        grid_spec=pltpu.PrefetchScalarGridSpec(
            num_scalar_prefetch=0,
            grid=(ncores, steps_per_core),
            in_specs=[
                pl.BlockSpec((N, C, tr, _LANES), in_map),
                pl.BlockSpec((N, C, tr, _LANES), in_map),
            ],
            out_specs=pl.BlockSpec((1, 2, tr, _LANES), lambda c, i: (c, 0, 0, 0)),
        ),
        compiler_params=pltpu.CompilerParams(
            dimension_semantics=("parallel", "arbitrary"),
            vmem_limit_bytes=vmem_limit,
        ),
    )(pred, out)

    num = jnp.sum(partials[:, 0])
    # Per-lane count partials are small exact integers -> int32 sum is exact.
    den = jnp.sum(partials[:, 1].astype(jnp.int32))
    # NOTE: den == 0 (all-zero x_output) yields NaN/Inf, matching PyTorch's 0-div.
    return num / den


def inverse_depth_l1_loss(x_pred, x_output, num_cores=None,
                          target_block_bytes=None):
    """x_pred, x_output: (N, C, H, W) float arrays. Returns a scalar float32 loss."""
    def_cores, def_block, vmem_cap = _tpu_defaults()
    if num_cores is None:
        num_cores = def_cores
    if target_block_bytes is None:
        target_block_bytes = def_block
    return _inverse_depth_l1_loss_impl(
        x_pred, x_output, num_cores=int(num_cores),
        target_block_bytes=int(target_block_bytes), vmem_cap_bytes=int(vmem_cap))


def _reference(x_pred, x_output):
    """Pure-JAX reference matching the PyTorch forward exactly."""
    binary_mask = (jnp.sum(x_output, axis=1) != 0).astype(jnp.float32)[:, None]  # (N,1,H,W)
    numer = jnp.sum(jnp.abs(x_pred - x_output) * binary_mask)
    denom = jnp.sum(binary_mask != 0)
    return numer / denom


def _make_inputs(key, shape, zero_frac=0.3):
    k1, k2, k3 = jax.random.split(key, 3)
    n, c, h, w = shape
    x_pred = jax.random.normal(k1, shape, dtype=jnp.float32)
    x_output = jax.random.normal(k2, shape, dtype=jnp.float32)
    # Zero out a fraction of pixels across all channels so the binary mask is
    # nontrivial (mimics invalid-depth regions).
    pix_mask = (jax.random.uniform(k3, (n, 1, h, w)) > zero_frac).astype(jnp.float32)
    return x_pred, x_output * pix_mask


if __name__ == "__main__":
    key = jax.random.PRNGKey(0)
    keys = jax.random.split(key, 3)

    # 1) Main case: exact tiling fast path (no validity mask, no pad).
    x_pred, x_output = _make_inputs(keys[0], (2, 4, 16, 16))
    loss = jax.block_until_ready(inverse_depth_l1_loss(x_pred, x_output))
    ref = _reference(x_pred, x_output)
    assert jnp.allclose(loss, ref, rtol=1e-5, atol=1e-6), (loss, ref)

    # 2) Coverage for the specialized-away machinery: forced tiny tiles with
    #    uneven tile count / uneven 2-core split / partial last tile.
    x_pred, x_output = _make_inputs(keys[1], (2, 3, 48, 48))
    loss = jax.block_until_ready(
        inverse_depth_l1_loss(x_pred, x_output, num_cores=2,
                              target_block_bytes=8 * 2 * 3 * _LANES * 4))
    ref = _reference(x_pred, x_output)
    assert jnp.allclose(loss, ref, rtol=1e-5, atol=1e-6), (loss, ref)

    # 3) Coverage for the H*W % 128 != 0 (padded) path.
    x_pred, x_output = _make_inputs(keys[2], (2, 4, 10, 10))
    loss = jax.block_until_ready(inverse_depth_l1_loss(x_pred, x_output))
    ref = _reference(x_pred, x_output)
    assert jnp.allclose(loss, ref, rtol=1e-5, atol=1e-6), (loss, ref)

    print("KERNEL_OK")
</pallas_src>

<mosaic_0001>
module attributes {stable_mosaic.version = 11 : i64} {
  func.func @_inv_depth_l1_kernel(%arg0: i32, %arg1: i32, %arg2: memref<2x4x2x128xf32, #tpu.memory_space<vmem>>, %arg3: memref<2x4x2x128xf32, #tpu.memory_space<vmem>>, %arg4: memref<1x2x2x128xf32, #tpu.memory_space<vmem>>) attributes {dimension_semantics = [#tpu.dimension_semantics<parallel>, #tpu.dimension_semantics<arbitrary>], iteration_bounds = array<i64: 1, 1>, scalar_prefetch = 0 : i64, scratch_operands = 0 : i64, tpu.core_type = #tpu.core_type<tc>, window_params = [{transform_indices = @transform_0, window_bounds = array<i64: 2, 4, 2, 128>}, {transform_indices = @transform_1, window_bounds = array<i64: 2, 4, 2, 128>}, {transform_indices = @transform_2, window_bounds = array<i64: 1, 2, 2, 128>}]} {
    %c0_i32 = arith.constant 0 : i32
    %0 = arith.cmpi eq, %arg1, %c0_i32 : i32
    %1 = arith.extui %0 : i1 to i32
    %c0_i32_0 = arith.constant 0 : i32
    %2 = arith.cmpi ne, %1, %c0_i32_0 : i32
    scf.if %2 {
      %cst_28 = arith.constant 0.000000e+00 : f32
      %29 = vector.broadcast %cst_28 : f32 to vector<1x2x2x128xf32>
      %c0_29 = arith.constant 0 : index
      %c0_30 = arith.constant 0 : index
      %c0_31 = arith.constant 0 : index
      %c0_32 = arith.constant 0 : index
      %30 = vector.load %arg4[%c0_29, %c0_30, %c0_31, %c0_32] : memref<1x2x2x128xf32, #tpu.memory_space<vmem>>, vector<1x2x2x128xf32>
      tpu.vector_store %arg4[%c0_29, %c0_30, %c0_31, %c0_32], %29 {strides = array<i32>} : memref<1x2x2x128xf32, #tpu.memory_space<vmem>>, vector<1x2x2x128xf32>,
    } else {
    }
    %c0 = arith.constant 0 : index
    %c0_1 = arith.constant 0 : index
    %c0_2 = arith.constant 0 : index
    %c0_3 = arith.constant 0 : index
    %3 = vector.load %arg2[%c0, %c0_1, %c0_2, %c0_3] : memref<2x4x2x128xf32, #tpu.memory_space<vmem>>, vector<2x4x2x128xf32>
    %c0_4 = arith.constant 0 : index
    %c0_5 = arith.constant 0 : index
    %c0_6 = arith.constant 0 : index
    %c0_7 = arith.constant 0 : index
    %4 = vector.load %arg3[%c0_4, %c0_5, %c0_6, %c0_7] : memref<2x4x2x128xf32, #tpu.memory_space<vmem>>, vector<2x4x2x128xf32>
    %cst = arith.constant dense<0.000000e+00> : vector<2x2x128xf32>
    %5 = vector.multi_reduction <add>, %4, %cst [1] : vector<2x4x2x128xf32> to vector<2x2x128xf32>
    %6 = arith.subf %3, %4 : vector<2x4x2x128xf32>
    %7 = math.absf %6 : vector<2x4x2x128xf32>
    %cst_8 = arith.constant dense<0.000000e+00> : vector<2x2x128xf32>
    %8 = vector.multi_reduction <add>, %7, %cst_8 [1] : vector<2x4x2x128xf32> to vector<2x2x128xf32>
    %cst_9 = arith.constant 0.000000e+00 : f32
    %9 = vector.broadcast %cst_9 : f32 to vector<2x2x128xf32>
    %10 = arith.cmpf one, %5, %9 : vector<2x2x128xf32>
    %cst_10 = arith.constant 0.000000e+00 : f32
    %11 = vector.broadcast %cst_10 : f32 to vector<2x2x128xf32>
    %12 = arith.select %10, %8, %11 : vector<2x2x128xi1>, vector<2x2x128xf32>
    %c0_11 = arith.constant 0 : index
    %c0_12 = arith.constant 0 : index
    %c0_13 = arith.constant 0 : index
    %c0_14 = arith.constant 0 : index
    %13 = vector.load %arg4[%c0_11, %c0_12, %c0_13, %c0_14] : memref<1x2x2x128xf32, #tpu.memory_space<vmem>>, vector<1x1x2x128xf32>
    %14 = vector.shape_cast %13 : vector<1x1x2x128xf32> to vector<2x128xf32>
    %cst_15 = arith.constant dense<0.000000e+00> : vector<2x128xf32>
    %15 = vector.multi_reduction <add>, %12, %cst_15 [0] : vector<2x2x128xf32> to vector<2x128xf32>
    %16 = arith.addf %14, %15 : vector<2x128xf32>
    %c0_16 = arith.constant 0 : index
    %c0_17 = arith.constant 0 : index
    %c0_18 = arith.constant 0 : index
    %c0_19 = arith.constant 0 : index
    %17 = vector.load %arg4[%c0_16, %c0_17, %c0_18, %c0_19] : memref<1x2x2x128xf32, #tpu.memory_space<vmem>>, vector<1x1x2x128xf32>
    %18 = vector.shape_cast %17 : vector<1x1x2x128xf32> to vector<2x128xf32>
    %19 = vector.shape_cast %16 : vector<2x128xf32> to vector<1x1x2x128xf32>
    tpu.vector_store %arg4[%c0_16, %c0_17, %c0_18, %c0_19], %19 {strides = array<i32>} : memref<1x2x2x128xf32, #tpu.memory_space<vmem>>, vector<1x1x2x128xf32>,
    %c0_20 = arith.constant 0 : index
    %c1 = arith.constant 1 : index
    %c0_21 = arith.constant 0 : index
    %c0_22 = arith.constant 0 : index
    %20 = vector.load %arg4[%c0_20, %c1, %c0_21, %c0_22] : memref<1x2x2x128xf32, #tpu.memory_space<vmem>>, vector<1x1x2x128xf32>
    %21 = vector.shape_cast %20 : vector<1x1x2x128xf32> to vector<2x128xf32>
    %22 = arith.extui %10 : vector<2x2x128xi1> to vector<2x2x128xi32>
    %23 = arith.sitofp %22 : vector<2x2x128xi32> to vector<2x2x128xf32>
    %cst_23 = arith.constant dense<0.000000e+00> : vector<2x128xf32>
    %24 = vector.multi_reduction <add>, %23, %cst_23 [0] : vector<2x2x128xf32> to vector<2x128xf32>
    %25 = arith.addf %21, %24 : vector<2x128xf32>
    %c0_24 = arith.constant 0 : index
    %c1_25 = arith.constant 1 : index
    %c0_26 = arith.constant 0 : index
    %c0_27 = arith.constant 0 : index
    %26 = vector.load %arg4[%c0_24, %c1_25, %c0_26, %c0_27] : memref<1x2x2x128xf32, #tpu.memory_space<vmem>>, vector<1x1x2x128xf32>
    %27 = vector.shape_cast %26 : vector<1x1x2x128xf32> to vector<2x128xf32>
    %28 = vector.shape_cast %25 : vector<2x128xf32> to vector<1x1x2x128xf32>
    tpu.vector_store %arg4[%c0_24, %c1_25, %c0_26, %c0_27], %28 {strides = array<i32>} : memref<1x2x2x128xf32, #tpu.memory_space<vmem>>, vector<1x1x2x128xf32>,
    return
  }
  func.func @transform_0(%arg0: i32, %arg1: i32) -> (i32, i32, i32, i32) {
    %c1_i32 = arith.constant 1 : i32
    %0 = arith.muli %arg0, %c1_i32 : i32
    %1 = arith.addi %0, %arg1 : i32
    %c0_i32 = arith.constant 0 : i32
    %c0_i32_0 = arith.constant 0 : i32
    %c0_i32_1 = arith.constant 0 : i32
    %c0_i32_2 = arith.constant 0 : i32
    return %c0_i32, %c0_i32_0, %1, %c0_i32_1 : i32, i32, i32, i32
  }
  func.func @transform_1(%arg0: i32, %arg1: i32) -> (i32, i32, i32, i32) {
    %c1_i32 = arith.constant 1 : i32
    %0 = arith.muli %arg0, %c1_i32 : i32
    %1 = arith.addi %0, %arg1 : i32
    %c0_i32 = arith.constant 0 : i32
    %c0_i32_0 = arith.constant 0 : i32
    %c0_i32_1 = arith.constant 0 : i32
    %c0_i32_2 = arith.constant 0 : i32
    return %c0_i32, %c0_i32_0, %1, %c0_i32_1 : i32, i32, i32, i32
  }
  func.func @transform_2(%arg0: i32, %arg1: i32) -> (i32, i32, i32, i32) {
    %c0_i32 = arith.constant 0 : i32
    %c0_i32_0 = arith.constant 0 : i32
    %c0_i32_1 = arith.constant 0 : i32
    %c0_i32_2 = arith.constant 0 : i32
    return %arg0, %c0_i32, %c0_i32_0, %c0_i32_1 : i32, i32, i32, i32
  }
}

</mosaic_0001>

<llo_original>
// kernel: _inverse_depth_l1_loss_impl.1
$region0: #{_inverse_depth_l1_loss_impl.1}
  #allocation0 [shape = 'u32[]', space=smem, size = 0x4, offset = 0x4, fixed_abs, tag = 'smem constant byte address 0x4 - core index']
  #allocation1 [shape = 'u32[72,128]{1,0:T(1,128)}', space=vmem, size = 0x9000, scoped, tag = 'internal scratch']
  %s0 = inlined_call_operand.vmem [shape: f32[2,4,2,128], index: 0, kind: input, shape index: {}]
  %s1 = inlined_call_operand.vmem [shape: f32[2,4,2,128], index: 1, kind: input, shape index: {}]
  %s2 = inlined_call_operand.vmem [shape: f32[1,2,2,128], index: 2, kind: output, shape index: {}]
  %s3 = sld [smem:[#allocation0]]
  $region22: #{_inverse_depth_l1_loss_impl.1} parent=0
    _
  %s5 = ssub.s32 1, %s3
  %s6 = scalar_select 0, %s5, %s3
  // Predicated region
  $region2: #{_inverse_depth_l1_loss_impl.1} parent=0 // pred_check
    _
  $region3: #{_inverse_depth_l1_loss_impl.1} parent=0 // pred_check_branch
    %8 = sbr.rel (0) target = $region5
  $region4: #{_inverse_depth_l1_loss_impl.1} parent=0 // pred_region
    %s9 = sadd.s32 0, 0
    %p10 = scmp.lt.s32.totalorder %s9, 0
    %s11 = scalar_select %p10, %s9, 0
    %s12 = smul.addr %s11, 2
    %s13 = scalar_lea.vmem %s0, %s12
    %s14 = sadd.s32 0, 0
  $region5: #{_inverse_depth_l1_loss_impl.1} parent=0 // pred_fallthru
    _
  // Predicated region
  $region6: #{_inverse_depth_l1_loss_impl.1} parent=0 // pred_check
    _
  $region7: #{_inverse_depth_l1_loss_impl.1} parent=0 // pred_check_branch
    %16 = sbr.rel (0) target = $region9
  $region8: #{_inverse_depth_l1_loss_impl.1} parent=0 // pred_region
    %s17 = sadd.s32 0, 0
    %p18 = scmp.lt.s32.totalorder %s17, 0
    %s19 = scalar_select %p18, %s17, 0
    %s20 = smul.addr %s19, 2
    %s21 = scalar_lea.vmem %s1, %s20
    %s22 = sadd.s32 0, 0
  $region9: #{_inverse_depth_l1_loss_impl.1} parent=0 // pred_fallthru
    _
  %s23 = sadd.s32 0, 0
  %p24 = scmp.lt.s32.totalorder %s23, 0
  %s25 = scalar_select %p24, %s23, 0
  %s26 = smul.addr %s25, 2
  %s27 = scalar_lea.vmem %s0, %s26
  %s28 = sadd.s32 0, 0
  %p29 = scmp.lt.s32.totalorder %s28, 0
  %s30 = scalar_select %p29, %s28, 0
  %s31 = smul.addr %s30, 2
  %s32 = scalar_lea.vmem %s1, %s31
  %s33 = sadd.s32 0, 0
  %p34 = scmp.lt.s32.totalorder %s33, 0
  %s35 = scalar_select %p34, %s33, 0
  %s36 = smul.addr %s35, 2
  %s37 = scalar_lea.vmem %s0, %s36
  %s38 = sadd.s32 0, 0
  %s39 = sadd.s32 0, 0
  %p40 = scmp.lt.s32.totalorder %s39, 0
  %s41 = scalar_select %p40, %s39, 0
  %s42 = smul.addr %s41, 2
  %s43 = scalar_lea.vmem %s1, %s42
  %s44 = sadd.s32 0, 0
  %p45 = scmp.eq.s32.totalorder 0, 0
  // Predicated region
  $region10: #{_inverse_depth_l1_loss_impl.1} parent=0 // pred_check
    %p46 = pneg %p45
  $region11: #{_inverse_depth_l1_loss_impl.1} parent=0 // pred_check_branch
    %48 = sbr.rel (%p46) target = $region13
  $region12: #{_inverse_depth_l1_loss_impl.1} parent=0 // pred_region
    %49 = vst [vmem:[%s2] sm:$0x3] 0.0
    %50 = vst [vmem:[%s2 + $0x2] sm:$0x3] 0.0
  $region13: #{_inverse_depth_l1_loss_impl.1} parent=0 // pred_fallthru
    _
  %v51 = vld [vmem:[%s37] sm:$0x3]
  %v52 = vld [vmem:[%s37 + $0x2] sm:$0x3]
  %v53 = vld [vmem:[%s37 + $0x4] sm:$0x3]
  %v54 = vld [vmem:[%s37 + $0x6] sm:$0x3]
  %v55 = vld [vmem:[%s37 + $0x8] sm:$0x3]
  %v56 = vld [vmem:[%s37 + $0xa] sm:$0x3]
  %v57 = vld [vmem:[%s37 + $0xc] sm:$0x3]
  %v58 = vld [vmem:[%s37 + $0xe] sm:$0x3]
  %v59 = vld [vmem:[%s43] sm:$0x3]
  %v60 = vld [vmem:[%s43 + $0x2] sm:$0x3]
  %v61 = vld [vmem:[%s43 + $0x4] sm:$0x3]
  %v62 = vld [vmem:[%s43 + $0x6] sm:$0x3]
  %v63 = vld [vmem:[%s43 + $0x8] sm:$0x3]
  %v64 = vld [vmem:[%s43 + $0xa] sm:$0x3]
  %v65 = vld [vmem:[%s43 + $0xc] sm:$0x3]
  %v66 = vld [vmem:[%s43 + $0xe] sm:$0x3]
  %vm67 = vcmask 1041408
  %v68 = vsel %vm67, %v59, 0.0
  %v69 = vsel %vm67, %v60, 0.0
  %v70 = vadd.f32 %v68, %v69
  %v71 = vsel %vm67, %v61, 0.0
  %v72 = vadd.f32 %v70, %v71
  %v73 = vsel %vm67, %v62, 0.0
  %v74 = vadd.f32 %v72, %v73
  %v75 = vsel %vm67, %v63, 0.0
  %v76 = vsel %vm67, %v64, 0.0
  %v77 = vadd.f32 %v75, %v76
  %v78 = vsel %vm67, %v65, 0.0
  %v79 = vadd.f32 %v77, %v78
  %v80 = vsel %vm67, %v66, 0.0
  %v81 = vadd.f32 %v79, %v80
  %v82 = vsub.f32 %v51, %v59
  %v83 = vsub.f32 %v52, %v60
  %v84 = vsub.f32 %v53, %v61
  %v85 = vsub.f32 %v54, %v62
  %v86 = vsub.f32 %v55, %v63
  %v87 = vsub.f32 %v56, %v64
  %v88 = vsub.f32 %v57, %v65
  %v89 = vsub.f32 %v58, %v66
  %v90 = vand.u32 2147483647, %v82
  %v91 = vand.u32 2147483647, %v83
  %v92 = vand.u32 2147483647, %v84
  %v93 = vand.u32 2147483647, %v85
  %v94 = vand.u32 2147483647, %v86
  %v95 = vand.u32 2147483647, %v87
  %v96 = vand.u32 2147483647, %v88
  %v97 = vand.u32 2147483647, %v89
  %v98 = vsel %vm67, %v90, 0.0
  %v99 = vsel %vm67, %v91, 0.0
  %v100 = vadd.f32 %v98, %v99
  %v101 = vsel %vm67, %v92, 0.0
  %v102 = vadd.f32 %v100, %v101
  %v103 = vsel %vm67, %v93, 0.0
  %v104 = vadd.f32 %v102, %v103
  %v105 = vsel %vm67, %v94, 0.0
  %v106 = vsel %vm67, %v95, 0.0
  %v107 = vadd.f32 %v105, %v106
  %v108 = vsel %vm67, %v96, 0.0
  %v109 = vadd.f32 %v107, %v108
  %v110 = vsel %vm67, %v97, 0.0
  %v111 = vadd.f32 %v109, %v110
  %vm112 = vcmp.ne.f32.partialorder %v74, 0.0
  %vm113 = vcmp.ne.f32.partialorder %v81, 0.0
  %v114 = vsel %vm112, %v104, 0.0
  %v115 = vsel %vm113, %v111, 0.0
  %v116 = vld [vmem:[%s2] sm:$0x3]
  %v117 = vsel %vm67, %v114, 0.0
  %v118 = vsel %vm67, %v115, 0.0
  %v119 = vadd.f32 %v117, %v118
  %v120 = vadd.f32 %v116, %v119
  %121 = vst [vmem:[%s2] sm:$0x3] %v120
  %s122 = scalar_lea.vmem %s2, 2
  %v123 = vld [vmem:[%s122] sm:$0x3]
  %v124 = vsel %vm112, 1, 0
  %v125 = vsel %vm113, 1, 0
  %v126 = vcvt.s32.f32 %v124
  %v127 = vcvt.s32.f32 %v125
  %v128 = vsel %vm67, %v126, 0.0
  %v129 = vsel %vm67, %v127, 0.0
  %v130 = vadd.f32 %v128, %v129
  %v131 = vadd.f32 %v123, %v130
  %132 = vst [vmem:[%s122] sm:$0x3] %v131
  // Predicated region
  $region14: #{_inverse_depth_l1_loss_impl.1} parent=0 // pred_check
    _
  $region15: #{_inverse_depth_l1_loss_impl.1} parent=0 // pred_check_branch
    %134 = sbr.rel (0) target = $region17
  $region16: #{_inverse_depth_l1_loss_impl.1} parent=0 // pred_region
    _
  $region17: #{_inverse_depth_l1_loss_impl.1} parent=0 // pred_fallthru
    _
  // Predicated region
  $region18: #{_inverse_depth_l1_loss_impl.1} parent=0 // pred_check
    _
  $region19: #{_inverse_depth_l1_loss_impl.1} parent=0 // pred_check_branch
    %136 = sbr.rel (0) target = $region21
  $region20: #{_inverse_depth_l1_loss_impl.1} parent=0 // pred_region
    _
  $region21: #{_inverse_depth_l1_loss_impl.1} parent=0 // pred_fallthru
    _

</llo_original>
